<compile_context>
chip_gen: v6e
topology: v6e:2x2x1
jax: 0.10.0
libtpu: 0.0.40
codegen_flags: <defaults>
</compile_context>

<pallas_src>
import functools

import jax
import jax.numpy as jnp
from jax.experimental import pallas as pl
from jax.experimental.pallas import tpu as pltpu


def _round_up(x, m):
    return (x + m - 1) // m * m


def _vmem_limit_bytes(buffer_bytes):
    """Scoped-VMEM request from the actual footprint (2x headroom), capped for v7x."""
    floor = 16 * 1024 * 1024
    cap = 48 * 1024 * 1024          # leave headroom under v7x's 64 MiB physical VMEM
    return int(min(max(2 * buffer_bytes, floor), cap))


# ----------------------------------------------------------------------------
# Kernel 1: per-edge message (fused attention matmul + sigmoid gate), edge grid.
# ----------------------------------------------------------------------------
def _message_kernel(x_ref, wattn_ref, battn_ref, walpha_ref, balpha_ref, msg_ref):
    in_dim = msg_ref.shape[1]
    x = x_ref[...]                                                  # (TE, 3*in_dim) bf16

    # fused attention: one (TE, 3*in_dim) @ (3*in_dim, attn_dim) bf16 MXU matmul
    s = jnp.dot(x, wattn_ref[...],
                preferred_element_type=jnp.float32) + battn_ref[...]
    s = jnp.maximum(s, 0.0)                                         # f32 (v5e: no bf16 VPU)

    # alpha = sigmoid(s @ w_alpha + b): VPU multiply + lane reduce (MXU stays free)
    logit = jnp.sum(s * walpha_ref[...], axis=-1, keepdims=True) + balpha_ref[...]
    alpha = jax.nn.sigmoid(logit)                                   # (TE, 1) f32

    hs = x[:, :in_dim].astype(jnp.float32)
    hr = x[:, in_dim:2 * in_dim].astype(jnp.float32)
    msg_ref[...] = (alpha * (hs + hr)).astype(msg_ref.dtype)        # bf16 store


# ----------------------------------------------------------------------------
# Kernel 2: scatter-sum (one-hot matmul) + W_h, grid = (node_blocks, edge_blocks).
# ----------------------------------------------------------------------------
def _scatter_kernel(msg_ref, obj_ref, wh_ref, out_ref, acc_ref):
    i = pl.program_id(0)                     # node-block index ("parallel")
    j = pl.program_id(1)                     # edge-block index (reduction, "arbitrary")
    tn = acc_ref.shape[0]

    @pl.when(j == 0)
    def _init():
        acc_ref[...] = jnp.zeros_like(acc_ref)

    # (TN, 1) node-id column vs (1, TE) obj row; broadcast compare -> (TN, TE)
    # one-hot segment matrix (0/1 exact in bf16).  Padded edges have obj = -1
    # (never matches) and zero features (zero message), so they contribute nothing.
    node_col = jax.lax.broadcasted_iota(jnp.int32, (tn, 1), 0) + i * tn
    seg = (node_col == obj_ref[...]).astype(jnp.bfloat16)

    acc_ref[...] += jnp.dot(seg, msg_ref[...],
                            preferred_element_type=jnp.float32)

    @pl.when(j == pl.num_programs(1) - 1)
    def _finalize():
        # hidden_new = act(W_h(message_agg)); act is identity by default.
        out_ref[...] = jnp.dot(acc_ref[...].astype(jnp.bfloat16), wh_ref[...],
                               preferred_element_type=jnp.float32
                               ).astype(out_ref.dtype)


# ----------------------------------------------------------------------------
# Wrapper: reproduces GNNLayer.forward semantics (act = identity).
# ----------------------------------------------------------------------------
def gnn_layer_forward(params, q_sub, q_rel, hidden, edges, n_node,
                      old_nodes_new_idx, *, te=1024, tn=512):
    del q_sub, old_nodes_new_idx  # unused in the reference forward

    edges = edges.astype(jnp.int32)
    sub, rel, obj, r_idx = edges[:, 4], edges[:, 2], edges[:, 5], edges[:, 0]

    # glue: gathers / embedding lookups stay in XLA.
    hs = hidden[sub].astype(jnp.float32)                              # (E, in_dim)
    hr = params["rela_embed"][rel].astype(jnp.float32)                # (E, in_dim)
    h_qr = params["rela_embed"][q_rel.astype(jnp.int32)][r_idx].astype(jnp.float32)

    E, in_dim = hs.shape
    attn_dim = params["Ws_attn"].shape[1]
    out_dim = params["W_h"].shape[1]

    # fuse the three attention linears into one matmul; stream operands as bf16
    x_cat = jnp.concatenate([hs, hr, h_qr], axis=1).astype(jnp.bfloat16)
    w_attn = jnp.concatenate(
        [params["Ws_attn"], params["Wr_attn"], params["Wqr_attn"]],
        axis=0).astype(jnp.bfloat16)                                  # (3*in_dim, attn_dim)

    # tile sizes (lane/sublane friendly), clamped to the padded problem
    te = _round_up(min(te, _round_up(E, 128)), 128)
    e_pad = _round_up(E, te)
    tn = _round_up(min(tn, _round_up(n_node, 8)), 8)
    n_node_pad = _round_up(n_node, tn)
    out_dim_pad = _round_up(out_dim, 128)            # lane-dense output stores

    # pad edge axis; padded edges: obj = -1 and zero features -> zero contribution
    x_p = jnp.pad(x_cat, ((0, e_pad - E), (0, 0)))
    obj_p = jnp.pad(obj, (0, e_pad - E), constant_values=-1).reshape(1, e_pad)

    b_attn = params["Wqr_attn_b"].reshape(1, attn_dim).astype(jnp.float32)
    w_alpha = params["w_alpha"].reshape(1, attn_dim).astype(jnp.float32)
    b_alpha = params["w_alpha_b"].reshape(1, 1).astype(jnp.float32)
    w_h = jnp.pad(params["W_h"].astype(jnp.bfloat16),
                  ((0, 0), (0, out_dim_pad - out_dim)))

    n_edge_blocks = e_pad // te
    n_node_blocks = n_node_pad // tn

    # ------------------------- kernel 1: messages -------------------------
    msg_vmem = (2 * te * 3 * in_dim * 2          # x tile, double-buffered
                + 2 * te * in_dim * 2            # message out tile, double-buffered
                + 3 * in_dim * attn_dim * 2      # fused attention weight
                + 4 * attn_dim * 4)              # biases / w_alpha
    cost_msg = pl.CostEstimate(
        flops=int(2 * e_pad * 3 * in_dim * attn_dim + 8 * e_pad * attn_dim
                  + 5 * e_pad * in_dim),
        transcendentals=int(e_pad),
        bytes_accessed=int(e_pad * 3 * in_dim * 2 + e_pad * in_dim * 2
                           + 3 * in_dim * attn_dim * 2 + 4 * attn_dim * 4),
    )
    message = pl.pallas_call(
        _message_kernel,
        out_shape=jax.ShapeDtypeStruct((e_pad, in_dim), jnp.bfloat16),
        grid_spec=pltpu.PrefetchScalarGridSpec(
            num_scalar_prefetch=0,
            grid=(n_edge_blocks,),
            in_specs=[
                pl.BlockSpec((te, 3 * in_dim), lambda j: (j, 0)),     # x_cat tile
                pl.BlockSpec((3 * in_dim, attn_dim), lambda j: (0, 0)),
                pl.BlockSpec((1, attn_dim), lambda j: (0, 0)),
                pl.BlockSpec((1, attn_dim), lambda j: (0, 0)),
                pl.BlockSpec((1, 1), lambda j: (0, 0)),
            ],
            out_specs=pl.BlockSpec((te, in_dim), lambda j: (j, 0)),
        ),
        compiler_params=pltpu.CompilerParams(
            dimension_semantics=("parallel",),
            vmem_limit_bytes=_vmem_limit_bytes(msg_vmem),
        ),
        cost_estimate=cost_msg,
    )(x_p, w_attn, b_attn, w_alpha, b_alpha)

    # ------------------- kernel 2: scatter-sum + W_h ----------------------
    scat_vmem = (2 * te * in_dim * 2             # message tile, double-buffered
                 + 2 * te * 4                    # obj tile, double-buffered
                 + in_dim * out_dim_pad * 2      # W_h
                 + 2 * tn * out_dim_pad * 4      # output tile, double-buffered
                 + tn * in_dim * 4               # accumulator scratch
                 + tn * te * 2)                  # one-hot seg temp
    cost_scat = pl.CostEstimate(
        flops=int(2 * e_pad * n_node_pad * in_dim
                  + 2 * n_node_pad * in_dim * out_dim_pad),
        transcendentals=0,
        bytes_accessed=int(n_node_blocks * (e_pad * in_dim * 2 + e_pad * 4)
                           + n_node_pad * out_dim_pad * 4
                           + in_dim * out_dim_pad * 2),
    )
    out_padded = pl.pallas_call(
        _scatter_kernel,
        out_shape=jax.ShapeDtypeStruct((n_node_pad, out_dim_pad), jnp.float32),
        grid_spec=pltpu.PrefetchScalarGridSpec(
            num_scalar_prefetch=0,
            grid=(n_node_blocks, n_edge_blocks),
            in_specs=[
                # NOTE: if profiling shows exposed DMA on this stream, deepen
                # pipelining with pipeline_mode=pl.Buffered(3).
                pl.BlockSpec((te, in_dim), lambda i, j: (j, 0)),      # message tile
                pl.BlockSpec((1, te), lambda i, j: (0, j)),           # obj tile
                pl.BlockSpec((in_dim, out_dim_pad), lambda i, j: (0, 0)),
            ],
            out_specs=pl.BlockSpec((tn, out_dim_pad), lambda i, j: (i, 0)),
            scratch_shapes=[pltpu.VMEM((tn, in_dim), jnp.float32)],
        ),
        compiler_params=pltpu.CompilerParams(
            dimension_semantics=("parallel", "arbitrary"),
            vmem_limit_bytes=_vmem_limit_bytes(scat_vmem),
        ),
        cost_estimate=cost_scat,
    )(message, obj_p, w_h)

    return out_padded[:n_node, :out_dim]


# ----------------------------------------------------------------------------
# Pure-JAX reference (mirrors the PyTorch forward) for a sanity check.
# ----------------------------------------------------------------------------
def _reference_forward(params, q_sub, q_rel, hidden, edges, n_node, old_nodes_new_idx):
    edges = edges.astype(jnp.int32)
    sub, rel, obj, r_idx = edges[:, 4], edges[:, 2], edges[:, 5], edges[:, 0]
    hs = hidden[sub]
    hr = params["rela_embed"][rel]
    h_qr = params["rela_embed"][q_rel.astype(jnp.int32)][r_idx]
    message = hs + hr
    s = jnp.maximum(hs @ params["Ws_attn"] + hr @ params["Wr_attn"]
                    + h_qr @ params["Wqr_attn"] + params["Wqr_attn_b"], 0.0)
    alpha = jax.nn.sigmoid(s @ params["w_alpha"] + params["w_alpha_b"])
    message = alpha * message
    agg = jnp.zeros((n_node, hs.shape[1]), jnp.float32).at[obj].add(message)
    return agg @ params["W_h"]


def init_params(key, in_dim, out_dim, attn_dim, n_rel):
    ks = jax.random.split(key, 7)
    scale = 0.1
    return {
        "rela_embed": scale * jax.random.normal(ks[0], (2 * n_rel + 1, in_dim), jnp.float32),
        "Ws_attn":    scale * jax.random.normal(ks[1], (in_dim, attn_dim), jnp.float32),
        "Wr_attn":    scale * jax.random.normal(ks[2], (in_dim, attn_dim), jnp.float32),
        "Wqr_attn":   scale * jax.random.normal(ks[3], (in_dim, attn_dim), jnp.float32),
        "Wqr_attn_b": scale * jax.random.normal(ks[4], (attn_dim,), jnp.float32),
        "w_alpha":    scale * jax.random.normal(ks[5], (attn_dim, 1), jnp.float32),
        "w_alpha_b":  jnp.zeros((1,), jnp.float32),
        "W_h":        scale * jax.random.normal(ks[6], (in_dim, out_dim), jnp.float32),
    }


if __name__ == "__main__":
    # small shapes consistent with the module
    in_dim, out_dim, attn_dim, n_rel = 32, 32, 16, 5
    batch = 2          # number of queries
    n_prev = 10        # rows in `hidden` (previous-layer nodes)
    n_node = 16        # rows in the output (new node set)
    n_edge = 300       # > 1 edge tile at te=128

    key = jax.random.PRNGKey(0)
    kp, k1, k2, k3, k4, k5, k6 = jax.random.split(key, 7)

    params = init_params(kp, in_dim, out_dim, attn_dim, n_rel)

    hidden = jax.random.normal(k1, (n_prev, in_dim), jnp.float32)
    q_sub = jax.random.randint(k2, (batch,), 0, n_prev, jnp.int32)          # unused by forward
    q_rel = jax.random.randint(k3, (batch,), 0, 2 * n_rel + 1, jnp.int32)

    # edges: [r_idx, _, rel, _, sub, obj]
    r_idx = jax.random.randint(k4, (n_edge,), 0, batch, jnp.int32)
    rel_c = jax.random.randint(k5, (n_edge,), 0, 2 * n_rel + 1, jnp.int32)
    sub_c = jax.random.randint(k6, (n_edge,), 0, n_prev, jnp.int32)
    obj_c = jax.random.randint(jax.random.fold_in(key, 99), (n_edge,), 0, n_node, jnp.int32)
    zeros = jnp.zeros((n_edge,), jnp.int32)
    edges = jnp.stack([r_idx, zeros, rel_c, zeros, sub_c, obj_c], axis=1)

    old_nodes_new_idx = jnp.arange(n_prev, dtype=jnp.int32)  # unused by forward

    fwd = functools.partial(gnn_layer_forward, params)
    # small tiles in the test to exercise multi-block node + edge grids
    out = fwd(q_sub, q_rel, hidden, edges, n_node, old_nodes_new_idx, te=128, tn=8)
    out = jax.block_until_ready(out)

    ref = _reference_forward(params, q_sub, q_rel, hidden, edges, n_node, old_nodes_new_idx)
    assert out.shape == (n_node, out_dim)
    # bf16 streamed operands / MXU matmuls -> slightly looser tolerance than pure-f32
    assert jnp.allclose(out, ref, atol=2e-2, rtol=2e-2), float(jnp.max(jnp.abs(out - ref)))

    print("KERNEL_OK")
</pallas_src>

<mosaic_0001>
module attributes {stable_mosaic.version = 11 : i64} {
  func.func @_message_kernel(%arg0: i32, %arg1: memref<128x96xbf16, #tpu.memory_space<vmem>>, %arg2: memref<96x16xbf16, #tpu.memory_space<vmem>>, %arg3: memref<1x16xf32, #tpu.memory_space<vmem>>, %arg4: memref<1x16xf32, #tpu.memory_space<vmem>>, %arg5: memref<1x1xf32, #tpu.memory_space<vmem>>, %arg6: memref<128x32xbf16, #tpu.memory_space<vmem>>) attributes {dimension_semantics = [#tpu.dimension_semantics<parallel>], iteration_bounds = array<i64: 3>, scalar_prefetch = 0 : i64, scratch_operands = 0 : i64, tpu.core_type = #tpu.core_type<tc>, window_params = [{transform_indices = @transform_0, window_bounds = array<i64: 128, 96>}, {pipeline_mode = #tpu.pipeline_mode<synchronous>, transform_indices = @transform_1, window_bounds = array<i64: 96, 16>}, {pipeline_mode = #tpu.pipeline_mode<synchronous>, transform_indices = @transform_2, window_bounds = array<i64: 1, 16>}, {pipeline_mode = #tpu.pipeline_mode<synchronous>, transform_indices = @transform_3, window_bounds = array<i64: 1, 16>}, {pipeline_mode = #tpu.pipeline_mode<synchronous>, transform_indices = @transform_4, window_bounds = array<i64: 1, 1>}, {transform_indices = @transform_5, window_bounds = array<i64: 128, 32>}]} {
    %c0 = arith.constant 0 : index
    %c0_0 = arith.constant 0 : index
    %0 = vector.load %arg1[%c0, %c0_0] : memref<128x96xbf16, #tpu.memory_space<vmem>>, vector<128x96xbf16>
    %c0_1 = arith.constant 0 : index
    %c0_2 = arith.constant 0 : index
    %1 = vector.load %arg2[%c0_1, %c0_2] : memref<96x16xbf16, #tpu.memory_space<vmem>>, vector<96x16xbf16>
    %cst = arith.constant dense<0.000000e+00> : vector<128x16xf32>
    %2 = tpu.matmul %0, %1, %cst {dimension_numbers = #tpu.dot_dimension_numbers<[1], [0], [0], [1], [0, 0, 1, 1], [], []>} : vector<128x96xbf16>, vector<96x16xbf16>, vector<128x16xf32> -> vector<128x16xf32>
    %c0_3 = arith.constant 0 : index
    %c0_4 = arith.constant 0 : index
    %3 = vector.load %arg3[%c0_3, %c0_4] : memref<1x16xf32, #tpu.memory_space<vmem>>, vector<1x16xf32>
    %4 = vector.broadcast %3 : vector<1x16xf32> to vector<128x16xf32>
    %5 = arith.addf %2, %4 : vector<128x16xf32>
    %cst_5 = arith.constant 0.000000e+00 : f32
    %6 = vector.broadcast %cst_5 : f32 to vector<128x16xf32>
    %7 = arith.maximumf %5, %6 : vector<128x16xf32>
    %c0_6 = arith.constant 0 : index
    %c0_7 = arith.constant 0 : index
    %8 = vector.load %arg4[%c0_6, %c0_7] : memref<1x16xf32, #tpu.memory_space<vmem>>, vector<1x16xf32>
    %9 = vector.broadcast %8 : vector<1x16xf32> to vector<128x16xf32>
    %10 = arith.mulf %7, %9 : vector<128x16xf32>
    %cst_8 = arith.constant dense<0.000000e+00> : vector<128xf32>
    %11 = vector.multi_reduction <add>, %10, %cst_8 [1] : vector<128x16xf32> to vector<128xf32>
    %12 = vector.shape_cast %11 : vector<128xf32> to vector<128x1xf32>
    %c0_9 = arith.constant 0 : index
    %c0_10 = arith.constant 0 : index
    %13 = vector.load %arg5[%c0_9, %c0_10] : memref<1x1xf32, #tpu.memory_space<vmem>>, vector<1x1xf32>
    %14 = vector.broadcast %13 : vector<1x1xf32> to vector<128x1xf32>
    %15 = arith.addf %12, %14 : vector<128x1xf32>
    %16 = arith.negf %15 : vector<128x1xf32>
    %17 = math.exp %16 : vector<128x1xf32>
    %cst_11 = arith.constant 1.000000e+00 : f32
    %18 = vector.broadcast %cst_11 : f32 to vector<128x1xf32>
    %19 = arith.addf %18, %17 : vector<128x1xf32>
    %20 = arith.divf %18, %19 : vector<128x1xf32>
    %21 = vector.extract_strided_slice %0 {offsets = [0, 0], sizes = [128, 32], strides = [1, 1]} : vector<128x96xbf16> to vector<128x32xbf16>
    %22 = arith.extf %21 : vector<128x32xbf16> to vector<128x32xf32>
    %23 = vector.extract_strided_slice %0 {offsets = [0, 32], sizes = [128, 32], strides = [1, 1]} : vector<128x96xbf16> to vector<128x32xbf16>
    %24 = arith.extf %23 : vector<128x32xbf16> to vector<128x32xf32>
    %25 = arith.addf %22, %24 : vector<128x32xf32>
    %26 = vector.broadcast %20 : vector<128x1xf32> to vector<128x32xf32>
    %27 = arith.mulf %26, %25 : vector<128x32xf32>
    %28 = arith.truncf %27 : vector<128x32xf32> to vector<128x32xbf16>
    %c0_12 = arith.constant 0 : index
    %c0_13 = arith.constant 0 : index
    %29 = vector.load %arg6[%c0_12, %c0_13] : memref<128x32xbf16, #tpu.memory_space<vmem>>, vector<128x32xbf16>
    tpu.vector_store %arg6[%c0_12, %c0_13], %28 {strides = array<i32>} : memref<128x32xbf16, #tpu.memory_space<vmem>>, vector<128x32xbf16>,
    return
  }
  func.func @transform_0(%arg0: i32) -> (i32, i32) {
    %c0_i32 = arith.constant 0 : i32
    %c0_i32_0 = arith.constant 0 : i32
    return %arg0, %c0_i32 : i32, i32
  }
  func.func @transform_1(%arg0: i32) -> (i32, i32) {
    %c0_i32 = arith.constant 0 : i32
    %c0_i32_0 = arith.constant 0 : i32
    %c0_i32_1 = arith.constant 0 : i32
    return %c0_i32, %c0_i32_0 : i32, i32
  }
  func.func @transform_2(%arg0: i32) -> (i32, i32) {
    %c0_i32 = arith.constant 0 : i32
    %c0_i32_0 = arith.constant 0 : i32
    %c0_i32_1 = arith.constant 0 : i32
    return %c0_i32, %c0_i32_0 : i32, i32
  }
  func.func @transform_3(%arg0: i32) -> (i32, i32) {
    %c0_i32 = arith.constant 0 : i32
    %c0_i32_0 = arith.constant 0 : i32
    %c0_i32_1 = arith.constant 0 : i32
    return %c0_i32, %c0_i32_0 : i32, i32
  }
  func.func @transform_4(%arg0: i32) -> (i32, i32) {
    %c0_i32 = arith.constant 0 : i32
    %c0_i32_0 = arith.constant 0 : i32
    %c0_i32_1 = arith.constant 0 : i32
    return %c0_i32, %c0_i32_0 : i32, i32
  }
  func.func @transform_5(%arg0: i32) -> (i32, i32) {
    %c0_i32 = arith.constant 0 : i32
    %c0_i32_0 = arith.constant 0 : i32
    return %arg0, %c0_i32 : i32, i32
  }
}

</mosaic_0001>

<llo_original>
// kernel: tpu_custom_call.1
$region0: #{tpu_custom_call.1}
  #allocation0 [shape = 'u32[]', space=smem, size = 0x4, offset = 0x4, fixed_abs, tag = 'smem constant byte address 0x4 - core index']
  #allocation1 [shape = 'u32[144,128]{1,0:T(1,128)}', space=vmem, size = 0x12000, scoped, tag = 'internal scratch']
  #allocation2 [shape = 'f32[1,1]{1,0:T(1,128)S(1)}', space=vmem, size = 0x200, scoped, tag = 'scoped memory for tpu_custom_call.1']
  %s0 = inlined_call_operand.vmem [shape: bf16[384,96], index: 0, kind: input, shape index: {}]
  %s1 = inlined_call_operand.vmem [shape: bf16[96,16], index: 1, kind: input, shape index: {}]
  %s2 = inlined_call_operand.vmem [shape: f32[1,16], index: 2, kind: input, shape index: {}]
  %s3 = inlined_call_operand.vmem [shape: f32[1,16], index: 3, kind: input, shape index: {}]
  %s4 = inlined_call_operand.<no memory space> [shape: f32[1,1], index: 4, kind: input, shape index: {}]
  %s5 = inlined_call_operand.vmem [shape: bf16[384,32], index: 5, kind: output, shape index: {}]
  %s6 = sld [smem:[#allocation0]]
  $region53: #{tpu_custom_call.1} parent=0
    _
  %s8 = ssub.s32 1, %s6
  %s9 = scalar_select 0, %s8, %s6
  %v10 = vstv %s4
  %11 = vst [vmem:[#allocation2] sm:$0x1] %v10
  loop: start=0, step=1, limit=5
  $region2: #{tpu_custom_call.1} parent=0 // loop_pre_header
    _
  $region3: #{tpu_custom_call.1} parent=0 // loop_header
    %s13 = sphi 0, %s17
    %p14 = scmp.ge.s32.totalorder %s13, 5
    %s23 = sphi 0, %s25
    %s26 = sphi 0, %s23
    %s27 = sphi 0, %s26
    %s43 = sphi 0, %s27
    %s47 = sphi 0, %s47
    %s49 = sphi 0, %s47
    %s50 = sphi 0, %s49
    %s64 = sphi 0, %s50
    %s68 = sphi 0, %s68
    %s70 = sphi 0, %s68
    %s71 = sphi 0, %s70
    %s85 = sphi 0, %s71
    %s89 = sphi 0, %s89
    %s91 = sphi 0, %s89
    %s92 = sphi 0, %s91
    %s106 = sphi 0, %s92
    %s110 = sphi 0, %s110
    %s112 = sphi 0, %s110
    %s113 = sphi 0, %s112
    %s127 = sphi 0, %s113
    %s133 = sphi 0, %s135
    %s136 = sphi 0, %s133
    %s137 = sphi 0, %s136
    %s153 = sphi 0, %s137
  $region4: #{tpu_custom_call.1} parent=0 // loop_header_branch
    %16 = sbr.rel (%p14) target = $region8
  $region5: #{tpu_custom_call.1} parent=0 // loop_body
    %s18 = ssub.s32 %s13, 1
    %s19 = ssub.s32 %s13, 2
    %s20 = sadd.s32 %s13, 1
    %s21 = ssub.s32 %s13, %s20
    %p22 = scmp.eq.s32.totalorder %s21, 0
    %s24 = sadd.s32 %s23, 1
    %s25 = scalar_select %p22, %s23, %s24
    %p28 = pneg %p22
    %p29 = scmp.eq.s32.totalorder %s13, 2
    %p30 = por %p28, %p29
    %p31 = scmp.ne.s32.totalorder %s23, %s26
    %p32 = scmp.eq.s32.totalorder %s13, 0
    %p33 = por %p31, %p32
    %p34 = scmp.ne.s32.totalorder %s23, %s26
    %p35 = scmp.eq.s32.totalorder %s18, 2
    %p36 = por %p34, %p35
    %p37 = scmp.ne.s32.totalorder %s26, %s27
    %p38 = scmp.eq.s32.totalorder %s18, 0
    %p39 = por %p37, %p38
    %p40 = scmp.ne.s32.totalorder %s26, %s27
    %p41 = scmp.eq.s32.totalorder %s19, 2
    %p42 = por %p40, %p41
    %p44 = scmp.ne.s32.totalorder %s27, %s43
    %p45 = scmp.eq.s32.totalorder %s19, 0
    %p46 = por %p44, %p45
    %s48 = sadd.s32 %s47, 1
    %p51 = scmp.eq.s32.totalorder %s13, 2
    %p52 = scmp.ne.s32.totalorder %s47, %s49
    %p53 = scmp.eq.s32.totalorder %s13, 0
    %p54 = por %p52, %p53
    %p55 = scmp.ne.s32.totalorder %s47, %s49
    %p56 = scmp.eq.s32.totalorder %s18, 2
    %p57 = por %p55, %p56
    %p58 = scmp.ne.s32.totalorder %s49, %s50
    %p59 = scmp.eq.s32.totalorder %s18, 0
    %p60 = por %p58, %p59
    %p61 = scmp.ne.s32.totalorder %s49, %s50
    %p62 = scmp.eq.s32.totalorder %s19, 2
    %p63 = por %p61, %p62
    %p65 = scmp.ne.s32.totalorder %s50, %s64
    %p66 = scmp.eq.s32.totalorder %s19, 0
    %p67 = por %p65, %p66
    %s69 = sadd.s32 %s68, 1
    %p72 = scmp.eq.s32.totalorder %s13, 2
    %p73 = scmp.ne.s32.totalorder %s68, %s70
    %p74 = scmp.eq.s32.totalorder %s13, 0
    %p75 = por %p73, %p74
    %p76 = scmp.ne.s32.totalorder %s68, %s70
    %p77 = scmp.eq.s32.totalorder %s18, 2
    %p78 = por %p76, %p77
    %p79 = scmp.ne.s32.totalorder %s70, %s71
    %p80 = scmp.eq.s32.totalorder %s18, 0
    %p81 = por %p79, %p80
    %p82 = scmp.ne.s32.totalorder %s70, %s71
    %p83 = scmp.eq.s32.totalorder %s19, 2
    %p84 = por %p82, %p83
    %p86 = scmp.ne.s32.totalorder %s71, %s85
    %p87 = scmp.eq.s32.totalorder %s19, 0
    %p88 = por %p86, %p87
    %s90 = sadd.s32 %s89, 1
    %p93 = scmp.eq.s32.totalorder %s13, 2
    %p94 = scmp.ne.s32.totalorder %s89, %s91
    %p95 = scmp.eq.s32.totalorder %s13, 0
    %p96 = por %p94, %p95
    %p97 = scmp.ne.s32.totalorder %s89, %s91
    %p98 = scmp.eq.s32.totalorder %s18, 2
    %p99 = por %p97, %p98
    %p100 = scmp.ne.s32.totalorder %s91, %s92
    %p101 = scmp.eq.s32.totalorder %s18, 0
    %p102 = por %p100, %p101
    %p103 = scmp.ne.s32.totalorder %s91, %s92
    %p104 = scmp.eq.s32.totalorder %s19, 2
    %p105 = por %p103, %p104
    %p107 = scmp.ne.s32.totalorder %s92, %s106
    %p108 = scmp.eq.s32.totalorder %s19, 0
    %p109 = por %p107, %p108
    %s111 = sadd.s32 %s110, 1
    %p114 = scmp.eq.s32.totalorder %s13, 2
    %p115 = scmp.ne.s32.totalorder %s110, %s112
    %p116 = scmp.eq.s32.totalorder %s13, 0
    %p117 = por %p115, %p116
    %p118 = scmp.ne.s32.totalorder %s110, %s112
    %p119 = scmp.eq.s32.totalorder %s18, 2
    %p120 = por %p118, %p119
    %p121 = scmp.ne.s32.totalorder %s112, %s113
    %p122 = scmp.eq.s32.totalorder %s18, 0
    %p123 = por %p121, %p122
    %p124 = scmp.ne.s32.totalorder %s112, %s113
    %p125 = scmp.eq.s32.totalorder %s19, 2
    %p126 = por %p124, %p125
    %p128 = scmp.ne.s32.totalorder %s113, %s127
    %p129 = scmp.eq.s32.totalorder %s19, 0
    %p130 = por %p128, %p129
    %s131 = ssub.s32 %s13, %s20
    %p132 = scmp.eq.s32.totalorder %s131, 0
    %s134 = sadd.s32 %s133, 1
    %s135 = scalar_select %p132, %s133, %s134
    %p138 = pneg %p132
    %p139 = scmp.eq.s32.totalorder %s13, 2
    %p140 = por %p138, %p139
    %p141 = scmp.ne.s32.totalorder %s133, %s136
    %p142 = scmp.eq.s32.totalorder %s13, 0
    %p143 = por %p141, %p142
    %p144 = scmp.ne.s32.totalorder %s133, %s136
    %p145 = scmp.eq.s32.totalorder %s18, 2
    %p146 = por %p144, %p145
    %p147 = scmp.ne.s32.totalorder %s136, %s137
    %p148 = scmp.eq.s32.totalorder %s18, 0
    %p149 = por %p147, %p148
    %p150 = scmp.ne.s32.totalorder %s136, %s137
    %p151 = scmp.eq.s32.totalorder %s19, 2
    %p152 = por %p150, %p151
    %p154 = scmp.ne.s32.totalorder %s137, %s153
    %p155 = scmp.eq.s32.totalorder %s19, 0
    %p156 = por %p154, %p155
    %p157 = scmp.le.s32.totalorder 1, %s13
    %p158 = scmp.lt.s32.totalorder %s13, 4
    %p159 = pnand %p157, %p158
    %p160 = pneg %p159
    // Predicated region
    $region9: #{tpu_custom_call.1} parent=5 // pred_check
      _
    $region10: #{tpu_custom_call.1} parent=5 // pred_check_branch
      %162 = sbr.rel (%p159) target = $region12
    $region11: #{tpu_custom_call.1} parent=5 // pred_region
      %s163 = ssub.s32 %s13, 1
      // Predicated region
      $region13: #{tpu_custom_call.1} parent=11 // pred_check
        %p164 = pneg %p60
      $region14: #{tpu_custom_call.1} parent=11 // pred_check_branch
        %166 = sbr.rel (%p164) target = $region16
      $region15: #{tpu_custom_call.1} parent=11 // pred_region
        _
      $region16: #{tpu_custom_call.1} parent=11 // pred_fallthru
        _
      // Predicated region
      $region17: #{tpu_custom_call.1} parent=11 // pred_check
        %p167 = pneg %p81
      $region18: #{tpu_custom_call.1} parent=11 // pred_check_branch
        %169 = sbr.rel (%p167) target = $region20
      $region19: #{tpu_custom_call.1} parent=11 // pred_region
        _
      $region20: #{tpu_custom_call.1} parent=11 // pred_fallthru
        _
      // Predicated region
      $region21: #{tpu_custom_call.1} parent=11 // pred_check
        %p170 = pneg %p102
      $region22: #{tpu_custom_call.1} parent=11 // pred_check_branch
        %172 = sbr.rel (%p170) target = $region24
      $region23: #{tpu_custom_call.1} parent=11 // pred_region
        _
      $region24: #{tpu_custom_call.1} parent=11 // pred_fallthru
        _
      // Predicated region
      $region25: #{tpu_custom_call.1} parent=11 // pred_check
        %p173 = pneg %p123
      $region26: #{tpu_custom_call.1} parent=11 // pred_check_branch
        %175 = sbr.rel (%p173) target = $region28
      $region27: #{tpu_custom_call.1} parent=11 // pred_region
        _
      $region28: #{tpu_custom_call.1} parent=11 // pred_fallthru
        _
    $region12: #{tpu_custom_call.1} parent=5 // pred_fallthru
      _
    %p176 = scmp.lt.s32.totalorder %s13, 3
    // Predicated region
    $region29: #{tpu_custom_call.1} parent=5 // pred_check
      %p177 = pneg %p176
    $region30: #{tpu_custom_call.1} parent=5 // pred_check_branch
      %179 = sbr.rel (%p177) target = $region32
    $region31: #{tpu_custom_call.1} parent=5 // pred_region
      // Predicated region
      $region33: #{tpu_custom_call.1} parent=31 // pred_check
        %p180 = pneg %p33
      $region34: #{tpu_custom_call.1} parent=31 // pred_check_branch
        %182 = sbr.rel (%p180) target = $region36
      $region35: #{tpu_custom_call.1} parent=31 // pred_region
        %s183 = smul.u32 16, %s13
        %p184 = scmp.lt.s32.totalorder %s183, 47
        %s185 = scalar_select %p184, %s183, 47
        %s186 = smul.addr %s185, 4
        %s187 = scalar_lea.vmem %s0, %s186
        %s188 = smul.u32 16, %s13
      $region36: #{tpu_custom_call.1} parent=31 // pred_fallthru
        _
    $region32: #{tpu_custom_call.1} parent=5 // pred_fallthru
      _
    %p189 = scmp.le.s32.totalorder 1, %s13
    %p190 = scmp.lt.s32.totalorder %s13, 4
    %p191 = pnand %p189, %p190
    %p192 = pneg %p191
    // Predicated region
    $region37: #{tpu_custom_call.1} parent=5 // pred_check
      _
    $region38: #{tpu_custom_call.1} parent=5 // pred_check_branch
      %194 = sbr.rel (%p191) target = $region40
    $region39: #{tpu_custom_call.1} parent=5 // pred_region
      %s195 = ssub.s32 %s13, 1
      %s196 = smul.u32 16, %s18
      %p197 = scmp.lt.s32.totalorder %s196, 47
      %s198 = scalar_select %p197, %s196, 47
      %s199 = smul.addr %s198, 4
      %s200 = scalar_lea.vmem %s0, %s199
      %p201 = pneg %p39
      %p202 = pneg %p36
      %p203 = pneg %p60
      %p204 = pneg %p57
      %p205 = pneg %p81
      %p206 = pneg %p78
      %p207 = pneg %p102
      %p208 = pneg %p99
      %p209 = pneg %p123
      %p210 = pneg %p120
      %p211 = pneg %p149
      %p212 = pneg %p146
      %s213 = smul.u32 16, %s18
      %p214 = scmp.lt.s32.totalorder %s213, 47
      %s215 = scalar_select %p214, %s213, 47
      %s216 = smul.addr %s215, 4
      %s217 = scalar_lea.vmem %s5, %s216
      %s218 = smul.u32 16, %s18
      %p219 = scmp.lt.s32.totalorder %s218, 47
      %s220 = scalar_select %p219, %s218, 47
      %s221 = smul.addr %s220, 4
      %s222 = scalar_lea.vmem %s0, %s221
      %s223 = smul.u32 16, %s18
      %s224 = smul.u32 16, %s18
      %p225 = scmp.lt.s32.totalorder %s224, 47
      %s226 = scalar_select %p225, %s224, 47
      %s227 = smul.addr %s226, 4
      %s228 = scalar_lea.vmem %s5, %s227
      %s229 = smul.u32 16, %s18
      %v231 = vld [vmem:[%s222] sm:$0xf]
      %v232 = vld [vmem:[%s222 + $0x4] sm:$0xf]
      %v233 = vld [vmem:[%s222 + $0x8] sm:$0xf]
      %v234 = vld [vmem:[%s222 + $0xc] sm:$0xf]
      %v235 = vld [vmem:[%s222 + $0x10] sm:$0xf]
      %v236 = vld [vmem:[%s222 + $0x14] sm:$0xf]
      %v237 = vld [vmem:[%s222 + $0x18] sm:$0xf]
      %v238 = vld [vmem:[%s222 + $0x1c] sm:$0xf]
      %v239 = vld [vmem:[%s222 + $0x20] sm:$0xf]
      %v240 = vld [vmem:[%s222 + $0x24] sm:$0xf]
      %v241 = vld [vmem:[%s222 + $0x28] sm:$0xf]
      %v242 = vld [vmem:[%s222 + $0x2c] sm:$0xf]
      %v243 = vld [vmem:[%s222 + $0x30] sm:$0xf]
      %v244 = vld [vmem:[%s222 + $0x34] sm:$0xf]
      %v245 = vld [vmem:[%s222 + $0x38] sm:$0xf]
      %v246 = vld [vmem:[%s222 + $0x3c] sm:$0xf]
      %v247 = vld [vmem:[%s1] sm:$0xf]
      %v248 = vld [vmem:[%s1 + $0x4] sm:$0xf]
      %v249 = vld [vmem:[%s1 + $0x8] sm:$0xf]
      %v250 = vld [vmem:[%s1 + $0xc] sm:$0xf]
      %v251 = vld [vmem:[%s1 + $0x10] sm:$0xf]
      %v252 = vld [vmem:[%s1 + $0x14] sm:$0xf]
      %v253 = vld [vmem:[%s1 + $0x18] sm:$0xf]
      %v254 = vld [vmem:[%s1 + $0x1c] sm:$0xf]
      %v255 = vld [vmem:[%s1 + $0x20] sm:$0xf]
      %v256 = vld [vmem:[%s1 + $0x24] sm:$0xf]
      %v257 = vld [vmem:[%s1 + $0x28] sm:$0xf]
      %v258 = vld [vmem:[%s1 + $0x2c] sm:$0xf]
      %v259 = vld [vmem:[%s2] sm:$0x1]
      %v261 = vlaneseq
      %v262 = vshrl.u32 %v261, 7
      %v263 = vsub.s32 0, %v262
      %v264 = vrot.slane %v259, %v263
      %v282 = vunpack.c.l.b16 %v231
      %v283 = vunpack.c.l.b16 %v232
      %v284 = vunpack.c.l.b16 %v233
      %v285 = vunpack.c.l.b16 %v234
      %v286 = vunpack.c.l.b16 %v235
      %v287 = vunpack.c.l.b16 %v236
      %v288 = vunpack.c.l.b16 %v237
      %v289 = vunpack.c.l.b16 %v238
      %v290 = vunpack.c.l.b16 %v239
      %v291 = vunpack.c.l.b16 %v240
      %v292 = vunpack.c.l.b16 %v241
      %v293 = vunpack.c.l.b16 %v242
      %v294 = vunpack.c.l.b16 %v243
      %v295 = vunpack.c.l.b16 %v244
      %v296 = vunpack.c.l.b16 %v245
      %v297 = vunpack.c.l.b16 %v246
      %v298 = vpack.c.b16 %v283, %v282
      %v299 = vpack.c.b16 %v285, %v284
      %v300 = vpack.c.b16 %v287, %v286
      %v301 = vpack.c.b16 %v289, %v288
      %v302 = vpack.c.b16 %v291, %v290
      %v303 = vpack.c.b16 %v293, %v292
      %v304 = vpack.c.b16 %v295, %v294
      %v305 = vpack.c.b16 %v297, %v296
      %v318 = vunpack.c.l.b16 %v247
      %v319 = vunpack.c.l.b16 %v248
      %v320 = vunpack.c.l.b16 %v249
      %v321 = vunpack.c.l.b16 %v250
      %v322 = vunpack.c.l.b16 %v251
      %v323 = vunpack.c.l.b16 %v252
      %v324 = vunpack.c.l.b16 %v253
      %v325 = vunpack.c.l.b16 %v254
      %v326 = vunpack.c.l.b16 %v255
      %v327 = vunpack.c.l.b16 %v256
      %v328 = vunpack.c.l.b16 %v257
      %v329 = vunpack.c.l.b16 %v258
      %v330 = vpack.c.b16 %v319, %v318
      %v331 = vpack.c.b16 %v321, %v320
      %v332 = vpack.c.b16 %v323, %v322
      %v333 = vpack.c.b16 %v325, %v324
      %v334 = vpack.c.b16 %v327, %v326
      %v335 = vpack.c.b16 %v329, %v328
      %vm342 = vcmask 785408
      %v344 = vsel %vm342, %v298, 0
      %v347 = vsel %vm342, %v299, 0
      %v350 = vsel %vm342, %v300, 0
      %v353 = vsel %vm342, %v301, 0
      %v356 = vsel %vm342, %v302, 0
      %v359 = vsel %vm342, %v303, 0
      %v362 = vsel %vm342, %v304, 0
      %v365 = vsel %vm342, %v305, 0
      %367 = vmatprep.subr.bf16.mxu0 0
      %368 = vmatpush1.bf16.msra.mxu0 0
      %369 = vmatprep.subr.bf16.mxu0 0
      %370 = vmatpush1.bf16.msra.mxu0 0
      %371 = vmatprep.subr.bf16.mxu0 0
      %372 = vmatpush1.bf16.msra.mxu0 %v335
      %373 = vmatprep.subr.bf16.mxu0 0
      %374 = vmatpush1.bf16.msra.mxu0 %v334
      %375 = vmatprep.subr.bf16.mxu0 0
      %376 = vmatpush1.bf16.msra.mxu0 %v333
      %377 = vmatprep.subr.bf16.mxu0 0
      %378 = vmatpush1.bf16.msra.mxu0 %v332
      %379 = vmatprep.subr.bf16.mxu0 0
      %380 = vmatpush1.bf16.msra.mxu0 %v331
      %381 = vmatprep.subr.bf16.mxu0 0
      %382 = vmatpush1.bf16.msra.mxu0 %v330
      %383 = vmatprep.subr.bf16.mxu0 0
      %384 = vmatpush2.bf16.msra.mxu0 0
      %385 = vmatprep.subr.bf16.mxu0 0
      %386 = vmatpush2.bf16.msra.mxu0 0
      %387 = vmatprep.subr.bf16.mxu0 0
      %388 = vmatpush2.bf16.msra.mxu0 0
      %389 = vmatprep.subr.bf16.mxu0 0
      %390 = vmatpush2.bf16.msra.mxu0 0
      %391 = vmatprep.subr.bf16.mxu0 0
      %392 = vmatpush2.bf16.msra.mxu0 0
      %393 = vmatprep.subr.bf16.mxu0 0
      %394 = vmatpush2.bf16.msra.mxu0 0
      %395 = vmatprep.subr.bf16.mxu0 0
      %396 = vmatpush2.bf16.msra.mxu0 0
      %397 = vmatprep.subr.bf16.mxu0 0
      %398 = vmatpush2.bf16.msra.mxu0 0
      %399 = vmatprep.mubr.bf16.mxu0 0
      %400 = vmatmul.mubr.bf16.gmra.mxu0 %v344
      %v401 = vpop.f32.mrf.mxu0
      %v402 = vadd.f32 %v264, %v401
      %v403 = vpop.f32.mrf.mxu0
      %v404 = vpop.f32.mrf.mxu0
      %v405 = vadd.f32 %v264, %v404
      %v406 = vpop.f32.mrf.mxu0
      %407 = vmatprep.mubr.bf16.mxu0 0
      %408 = vmatmul.mubr.bf16.gmra.mxu0 %v347
      %v409 = vpop.f32.mrf.mxu0
      %v410 = vadd.f32 %v264, %v409
      %v411 = vpop.f32.mrf.mxu0
      %v412 = vpop.f32.mrf.mxu0
      %v413 = vadd.f32 %v264, %v412
      %v414 = vpop.f32.mrf.mxu0
      %415 = vmatprep.mubr.bf16.mxu0 0
      %416 = vmatmul.mubr.bf16.gmra.mxu0 %v350
      %v417 = vpop.f32.mrf.mxu0
      %v418 = vadd.f32 %v264, %v417
      %v419 = vpop.f32.mrf.mxu0
      %v420 = vpop.f32.mrf.mxu0
      %v421 = vadd.f32 %v264, %v420
      %v422 = vpop.f32.mrf.mxu0
      %423 = vmatprep.mubr.bf16.mxu0 0
      %424 = vmatmul.mubr.bf16.gmra.mxu0 %v353
      %v425 = vpop.f32.mrf.mxu0
      %v426 = vadd.f32 %v264, %v425
      %v427 = vpop.f32.mrf.mxu0
      %v428 = vpop.f32.mrf.mxu0
      %v429 = vadd.f32 %v264, %v428
      %v430 = vpop.f32.mrf.mxu0
      %431 = vmatprep.mubr.bf16.mxu0 0
      %432 = vmatmul.mubr.bf16.gmra.mxu0 %v356
      %v433 = vpop.f32.mrf.mxu0
      %v434 = vadd.f32 %v264, %v433
      %v435 = vpop.f32.mrf.mxu0
      %v436 = vpop.f32.mrf.mxu0
      %v437 = vadd.f32 %v264, %v436
      %v438 = vpop.f32.mrf.mxu0
      %439 = vmatprep.mubr.bf16.mxu0 0
      %440 = vmatmul.mubr.bf16.gmra.mxu0 %v359
      %v441 = vpop.f32.mrf.mxu0
      %v442 = vadd.f32 %v264, %v441
      %v443 = vpop.f32.mrf.mxu0
      %v444 = vpop.f32.mrf.mxu0
      %v445 = vadd.f32 %v264, %v444
      %v446 = vpop.f32.mrf.mxu0
      %447 = vmatprep.mubr.bf16.mxu0 0
      %448 = vmatmul.mubr.bf16.gmra.mxu0 %v362
      %v449 = vpop.f32.mrf.mxu0
      %v450 = vadd.f32 %v264, %v449
      %v451 = vpop.f32.mrf.mxu0
      %v452 = vpop.f32.mrf.mxu0
      %v453 = vadd.f32 %v264, %v452
      %v454 = vpop.f32.mrf.mxu0
      %455 = vmatprep.mubr.bf16.mxu0 0
      %456 = vmatmul.mubr.bf16.gmra.mxu0 %v365
      %v457 = vpop.f32.mrf.mxu0
      %v458 = vadd.f32 %v264, %v457
      %v459 = vpop.f32.mrf.mxu0
      %v460 = vpop.f32.mrf.mxu0
      %v461 = vadd.f32 %v264, %v460
      %v462 = vpop.f32.mrf.mxu0
      %463 = vdwg.mxu0
      %v464 = vmax.f32 %v402, 0.0
      %v465 = vmax.f32 %v405, 0.0
      %v466 = vmax.f32 %v410, 0.0
      %v467 = vmax.f32 %v413, 0.0
      %v468 = vmax.f32 %v418, 0.0
      %v469 = vmax.f32 %v421, 0.0
      %v470 = vmax.f32 %v426, 0.0
      %v471 = vmax.f32 %v429, 0.0
      %v472 = vmax.f32 %v434, 0.0
      %v473 = vmax.f32 %v437, 0.0
      %v474 = vmax.f32 %v442, 0.0
      %v475 = vmax.f32 %v445, 0.0
      %v476 = vmax.f32 %v450, 0.0
      %v477 = vmax.f32 %v453, 0.0
      %v478 = vmax.f32 %v458, 0.0
      %v479 = vmax.f32 %v461, 0.0
      %v480 = vld [vmem:[%s3] sm:$0x1]
      %v482 = vlaneseq
      %v483 = vshrl.u32 %v482, 7
      %v484 = vsub.s32 0, %v483
      %v485 = vrot.slane %v480, %v484
      %v487 = vmul.f32 %v464, %v485
      %v488 = vmul.f32 %v465, %v485
      %v489 = vmul.f32 %v466, %v485
      %v490 = vmul.f32 %v467, %v485
      %v491 = vmul.f32 %v468, %v485
      %v492 = vmul.f32 %v469, %v485
      %v493 = vmul.f32 %v470, %v485
      %v494 = vmul.f32 %v471, %v485
      %v495 = vmul.f32 %v472, %v485
      %v496 = vmul.f32 %v473, %v485
      %v497 = vmul.f32 %v474, %v485
      %v498 = vmul.f32 %v475, %v485
      %v499 = vmul.f32 %v476, %v485
      %v500 = vmul.f32 %v477, %v485
      %v501 = vmul.f32 %v478, %v485
      %v502 = vmul.f32 %v479, %v485
      %vm503 = vcmask 130048
      %v504 = vsel %vm503, %v487, 0.0
      %505 = vadd.xlane.f32.xlu0 %v504
      %v506 = vpop.xlane.xlu0 %505
      %v507 = vsel %vm503, %v488, 0.0
      %508 = vadd.xlane.f32.xlu0 %v507
      %v509 = vpop.xlane.xlu0 %508
      %v510 = vsel %vm503, %v489, 0.0
      %511 = vadd.xlane.f32.xlu0 %v510
      %v512 = vpop.xlane.xlu0 %511
      %v513 = vsel %vm503, %v490, 0.0
      %514 = vadd.xlane.f32.xlu0 %v513
      %v515 = vpop.xlane.xlu0 %514
      %v516 = vsel %vm503, %v491, 0.0
      %517 = vadd.xlane.f32.xlu0 %v516
      %v518 = vpop.xlane.xlu0 %517
      %v519 = vsel %vm503, %v492, 0.0
      %520 = vadd.xlane.f32.xlu0 %v519
      %v521 = vpop.xlane.xlu0 %520
      %v522 = vsel %vm503, %v493, 0.0
      %523 = vadd.xlane.f32.xlu0 %v522
      %v524 = vpop.xlane.xlu0 %523
      %v525 = vsel %vm503, %v494, 0.0
      %526 = vadd.xlane.f32.xlu0 %v525
      %v527 = vpop.xlane.xlu0 %526
      %v528 = vsel %vm503, %v495, 0.0
      %529 = vadd.xlane.f32.xlu0 %v528
      %v530 = vpop.xlane.xlu0 %529
      %v531 = vsel %vm503, %v496, 0.0
      %532 = vadd.xlane.f32.xlu0 %v531
      %v533 = vpop.xlane.xlu0 %532
      %v534 = vsel %vm503, %v497, 0.0
      %535 = vadd.xlane.f32.xlu0 %v534
      %v536 = vpop.xlane.xlu0 %535
      %v537 = vsel %vm503, %v498, 0.0
      %538 = vadd.xlane.f32.xlu0 %v537
      %v539 = vpop.xlane.xlu0 %538
      %v540 = vsel %vm503, %v499, 0.0
      %541 = vadd.xlane.f32.xlu0 %v540
      %v542 = vpop.xlane.xlu0 %541
      %v543 = vsel %vm503, %v500, 0.0
      %544 = vadd.xlane.f32.xlu0 %v543
      %v545 = vpop.xlane.xlu0 %544
      %v546 = vsel %vm503, %v501, 0.0
      %547 = vadd.xlane.f32.xlu0 %v546
      %v548 = vpop.xlane.xlu0 %547
      %v549 = vsel %vm503, %v502, 0.0
      %550 = vadd.xlane.f32.xlu0 %v549
      %v551 = vpop.xlane.xlu0 %550
      %v552 = vld [vmem:[#allocation2] sm:$0x1]
      %v554 = vlaneseq
      %v555 = vshrl.u32 %v554, 7
      %v556 = vsub.s32 0, %v555
      %v557 = vrot.slane %v552, %v556
      %v559 = vadd.f32 %v506, %v557
      %v560 = vadd.f32 %v509, %v557
      %v561 = vadd.f32 %v512, %v557
      %v562 = vadd.f32 %v515, %v557
      %v563 = vadd.f32 %v518, %v557
      %v564 = vadd.f32 %v521, %v557
      %v565 = vadd.f32 %v524, %v557
      %v566 = vadd.f32 %v527, %v557
      %v567 = vadd.f32 %v530, %v557
      %v568 = vadd.f32 %v533, %v557
      %v569 = vadd.f32 %v536, %v557
      %v570 = vadd.f32 %v539, %v557
      %v571 = vadd.f32 %v542, %v557
      %v572 = vadd.f32 %v545, %v557
      %v573 = vadd.f32 %v548, %v557
      %v574 = vadd.f32 %v551, %v557
      %v575 = vxor.u32 %v559, 2147483648
      %v576 = vxor.u32 %v560, 2147483648
      %v577 = vxor.u32 %v561, 2147483648
      %v578 = vxor.u32 %v562, 2147483648
      %v579 = vxor.u32 %v563, 2147483648
      %v580 = vxor.u32 %v564, 2147483648
      %v581 = vxor.u32 %v565, 2147483648
      %v582 = vxor.u32 %v566, 2147483648
      %v583 = vxor.u32 %v567, 2147483648
      %v584 = vxor.u32 %v568, 2147483648
      %v585 = vxor.u32 %v569, 2147483648
      %v586 = vxor.u32 %v570, 2147483648
      %v587 = vxor.u32 %v571, 2147483648
      %v588 = vxor.u32 %v572, 2147483648
      %v589 = vxor.u32 %v573, 2147483648
      %v590 = vxor.u32 %v574, 2147483648
      %v591 = vmul.f32 %v575, 1.442695
      %v592 = vpow.pop %v591
      %v593 = vmul.f32 %v576, 1.442695
      %v594 = vpow.pop %v593
      %v595 = vmul.f32 %v577, 1.442695
      %v596 = vpow.pop %v595
      %v597 = vmul.f32 %v578, 1.442695
      %v598 = vpow.pop %v597
      %v599 = vmul.f32 %v579, 1.442695
      %v600 = vpow.pop %v599
      %v601 = vmul.f32 %v580, 1.442695
      %v602 = vpow.pop %v601
      %v603 = vmul.f32 %v581, 1.442695
      %v604 = vpow.pop %v603
      %v605 = vmul.f32 %v582, 1.442695
      %v606 = vpow.pop %v605
      %v607 = vmul.f32 %v583, 1.442695
      %v608 = vpow.pop %v607
      %v609 = vmul.f32 %v584, 1.442695
      %v610 = vpow.pop %v609
      %v611 = vmul.f32 %v585, 1.442695
      %v612 = vpow.pop %v611
      %v613 = vmul.f32 %v586, 1.442695
      %v614 = vpow.pop %v613
      %v615 = vmul.f32 %v587, 1.442695
      %v616 = vpow.pop %v615
      %v617 = vmul.f32 %v588, 1.442695
      %v618 = vpow.pop %v617
      %v619 = vmul.f32 %v589, 1.442695
      %v620 = vpow.pop %v619
      %v621 = vmul.f32 %v590, 1.442695
      %v622 = vpow.pop %v621
      %v623 = vadd.f32 %v592, 1.0
      %v624 = vadd.f32 %v594, 1.0
      %v625 = vadd.f32 %v596, 1.0
      %v626 = vadd.f32 %v598, 1.0
      %v627 = vadd.f32 %v600, 1.0
      %v628 = vadd.f32 %v602, 1.0
      %v629 = vadd.f32 %v604, 1.0
      %v630 = vadd.f32 %v606, 1.0
      %v631 = vadd.f32 %v608, 1.0
      %v632 = vadd.f32 %v610, 1.0
      %v633 = vadd.f32 %v612, 1.0
      %v634 = vadd.f32 %v614, 1.0
      %v635 = vadd.f32 %v616, 1.0
      %v636 = vadd.f32 %v618, 1.0
      %v637 = vadd.f32 %v620, 1.0
      %v638 = vadd.f32 %v622, 1.0
      %v639 = vrcp.pop %v623
      %v640 = vmul.f32 1.0, %v639
      %v641 = vrcp.pop %v624
      %v642 = vmul.f32 1.0, %v641
      %v643 = vrcp.pop %v625
      %v644 = vmul.f32 1.0, %v643
      %v645 = vrcp.pop %v626
      %v646 = vmul.f32 1.0, %v645
      %v647 = vrcp.pop %v627
      %v648 = vmul.f32 1.0, %v647
      %v649 = vrcp.pop %v628
      %v650 = vmul.f32 1.0, %v649
      %v651 = vrcp.pop %v629
      %v652 = vmul.f32 1.0, %v651
      %v653 = vrcp.pop %v630
      %v654 = vmul.f32 1.0, %v653
      %v655 = vrcp.pop %v631
      %v656 = vmul.f32 1.0, %v655
      %v657 = vrcp.pop %v632
      %v658 = vmul.f32 1.0, %v657
      %v659 = vrcp.pop %v633
      %v660 = vmul.f32 1.0, %v659
      %v661 = vrcp.pop %v634
      %v662 = vmul.f32 1.0, %v661
      %v663 = vrcp.pop %v635
      %v664 = vmul.f32 1.0, %v663
      %v665 = vrcp.pop %v636
      %v666 = vmul.f32 1.0, %v665
      %v667 = vrcp.pop %v637
      %v668 = vmul.f32 1.0, %v667
      %v669 = vrcp.pop %v638
      %v670 = vmul.f32 1.0, %v669
      %v671 = vunpack.c.l.bf16 %v231
      %v672 = vunpack.c.l.bf16 %v232
      %v673 = vunpack.c.l.bf16 %v233
      %v674 = vunpack.c.l.bf16 %v234
      %v675 = vunpack.c.l.bf16 %v235
      %v676 = vunpack.c.l.bf16 %v236
      %v677 = vunpack.c.l.bf16 %v237
      %v678 = vunpack.c.l.bf16 %v238
      %v679 = vunpack.c.l.bf16 %v239
      %v680 = vunpack.c.l.bf16 %v240
      %v681 = vunpack.c.l.bf16 %v241
      %v682 = vunpack.c.l.bf16 %v242
      %v683 = vunpack.c.l.bf16 %v243
      %v684 = vunpack.c.l.bf16 %v244
      %v685 = vunpack.c.l.bf16 %v245
      %v686 = vunpack.c.l.bf16 %v246
      %703 = vrot.lane.b32.xlu0 %v671, 96
      %v704 = vpop.permute.xlu0 %703
      %705 = vrot.lane.b32.xlu0 %v672, 96
      %v706 = vpop.permute.xlu0 %705
      %707 = vrot.lane.b32.xlu0 %v673, 96
      %v708 = vpop.permute.xlu0 %707
      %709 = vrot.lane.b32.xlu0 %v674, 96
      %v710 = vpop.permute.xlu0 %709
      %711 = vrot.lane.b32.xlu0 %v675, 96
      %v712 = vpop.permute.xlu0 %711
      %713 = vrot.lane.b32.xlu0 %v676, 96
      %v714 = vpop.permute.xlu0 %713
      %715 = vrot.lane.b32.xlu0 %v677, 96
      %v716 = vpop.permute.xlu0 %715
      %717 = vrot.lane.b32.xlu0 %v678, 96
      %v718 = vpop.permute.xlu0 %717
      %719 = vrot.lane.b32.xlu0 %v679, 96
      %v720 = vpop.permute.xlu0 %719
      %721 = vrot.lane.b32.xlu0 %v680, 96
      %v722 = vpop.permute.xlu0 %721
      %723 = vrot.lane.b32.xlu0 %v681, 96
      %v724 = vpop.permute.xlu0 %723
      %725 = vrot.lane.b32.xlu0 %v682, 96
      %v726 = vpop.permute.xlu0 %725
      %727 = vrot.lane.b32.xlu0 %v683, 96
      %v728 = vpop.permute.xlu0 %727
      %729 = vrot.lane.b32.xlu0 %v684, 96
      %v730 = vpop.permute.xlu0 %729
      %731 = vrot.lane.b32.xlu0 %v685, 96
      %v732 = vpop.permute.xlu0 %731
      %733 = vrot.lane.b32.xlu0 %v686, 96
      %v734 = vpop.permute.xlu0 %733
      %v751 = vadd.f32 %v671, %v704
      %v752 = vadd.f32 %v672, %v706
      %v753 = vadd.f32 %v673, %v708
      %v754 = vadd.f32 %v674, %v710
      %v755 = vadd.f32 %v675, %v712
      %v756 = vadd.f32 %v676, %v714
      %v757 = vadd.f32 %v677, %v716
      %v758 = vadd.f32 %v678, %v718
      %v759 = vadd.f32 %v679, %v720
      %v760 = vadd.f32 %v680, %v722
      %v761 = vadd.f32 %v681, %v724
      %v762 = vadd.f32 %v682, %v726
      %v763 = vadd.f32 %v683, %v728
      %v764 = vadd.f32 %v684, %v730
      %v765 = vadd.f32 %v685, %v732
      %v766 = vadd.f32 %v686, %v734
      %768 = vset.pattern.permute.xlu0 0
      %769 = vperm.xlu0 %768, %v640
      %v770 = vpop.permute.xlu0 %769
      %773 = vset.pattern.permute.xlu0 0
      %774 = vperm.xlu0 %773, %v642
      %v775 = vpop.permute.xlu0 %774
      %778 = vset.pattern.permute.xlu0 0
      %779 = vperm.xlu0 %778, %v644
      %v780 = vpop.permute.xlu0 %779
      %783 = vset.pattern.permute.xlu0 0
      %784 = vperm.xlu0 %783, %v646
      %v785 = vpop.permute.xlu0 %784
      %788 = vset.pattern.permute.xlu0 0
      %789 = vperm.xlu0 %788, %v648
      %v790 = vpop.permute.xlu0 %789
      %793 = vset.pattern.permute.xlu0 0
      %794 = vperm.xlu0 %793, %v650
      %v795 = vpop.permute.xlu0 %794
      %798 = vset.pattern.permute.xlu0 0
      %799 = vperm.xlu0 %798, %v652
      %v800 = vpop.permute.xlu0 %799
      %803 = vset.pattern.permute.xlu0 0
      %804 = vperm.xlu0 %803, %v654
      %v805 = vpop.permute.xlu0 %804
      %808 = vset.pattern.permute.xlu0 0
      %809 = vperm.xlu0 %808, %v656
      %v810 = vpop.permute.xlu0 %809
      %813 = vset.pattern.permute.xlu0 0
      %814 = vperm.xlu0 %813, %v658
      %v815 = vpop.permute.xlu0 %814
      %818 = vset.pattern.permute.xlu0 0
      %819 = vperm.xlu0 %818, %v660
      %v820 = vpop.permute.xlu0 %819
      %823 = vset.pattern.permute.xlu0 0
      %824 = vperm.xlu0 %823, %v662
      %v825 = vpop.permute.xlu0 %824
      %828 = vset.pattern.permute.xlu0 0
      %829 = vperm.xlu0 %828, %v664
      %v830 = vpop.permute.xlu0 %829
      %833 = vset.pattern.permute.xlu0 0
      %834 = vperm.xlu0 %833, %v666
      %v835 = vpop.permute.xlu0 %834
      %838 = vset.pattern.permute.xlu0 0
      %839 = vperm.xlu0 %838, %v668
      %v840 = vpop.permute.xlu0 %839
      %843 = vset.pattern.permute.xlu0 0
      %844 = vperm.xlu0 %843, %v670
      %v845 = vpop.permute.xlu0 %844
      %v847 = vmul.f32 %v770, %v751
      %v848 = vmul.f32 %v775, %v752
      %v849 = vmul.f32 %v780, %v753
      %v850 = vmul.f32 %v785, %v754
      %v851 = vmul.f32 %v790, %v755
      %v852 = vmul.f32 %v795, %v756
      %v853 = vmul.f32 %v800, %v757
      %v854 = vmul.f32 %v805, %v758
      %v855 = vmul.f32 %v810, %v759
      %v856 = vmul.f32 %v815, %v760
      %v857 = vmul.f32 %v820, %v761
      %v858 = vmul.f32 %v825, %v762
      %v859 = vmul.f32 %v830, %v763
      %v860 = vmul.f32 %v835, %v764
      %v861 = vmul.f32 %v840, %v765
      %v862 = vmul.f32 %v845, %v766
      %v863 = vpack.c.bf16 %v848, %v847
      %v864 = vpack.c.bf16 %v850, %v849
      %v865 = vpack.c.bf16 %v852, %v851
      %v866 = vpack.c.bf16 %v854, %v853
      %v867 = vpack.c.bf16 %v856, %v855
      %v868 = vpack.c.bf16 %v858, %v857
      %v869 = vpack.c.bf16 %v860, %v859
      %v870 = vpack.c.bf16 %v862, %v861
      %v879 = vunpack.c.l.b16 %v863
      %v880 = vunpack.c.h.b16 %v863
      %v881 = vunpack.c.l.b16 %v864
      %v882 = vunpack.c.h.b16 %v864
      %v883 = vunpack.c.l.b16 %v865
      %v884 = vunpack.c.h.b16 %v865
      %v885 = vunpack.c.l.b16 %v866
      %v886 = vunpack.c.h.b16 %v866
      %v887 = vunpack.c.l.b16 %v867
      %v888 = vunpack.c.h.b16 %v867
      %v889 = vunpack.c.l.b16 %v868
      %v890 = vunpack.c.h.b16 %v868
      %v891 = vunpack.c.l.b16 %v869
      %v892 = vunpack.c.h.b16 %v869
      %v893 = vunpack.c.l.b16 %v870
      %v894 = vunpack.c.h.b16 %v870
      %v895 = vpack.c.b16 %v879, %v879
      %v896 = vpack.c.b16 %v880, %v880
      %v897 = vpack.c.b16 %v881, %v881
      %v898 = vpack.c.b16 %v882, %v882
      %v899 = vpack.c.b16 %v883, %v883
      %v900 = vpack.c.b16 %v884, %v884
      %v901 = vpack.c.b16 %v885, %v885
      %v902 = vpack.c.b16 %v886, %v886
      %v903 = vpack.c.b16 %v887, %v887
      %v904 = vpack.c.b16 %v888, %v888
      %v905 = vpack.c.b16 %v889, %v889
      %v906 = vpack.c.b16 %v890, %v890
      %v907 = vpack.c.b16 %v891, %v891
      %v908 = vpack.c.b16 %v892, %v892
      %v909 = vpack.c.b16 %v893, %v893
      %v910 = vpack.c.b16 %v894, %v894
      %vm927 = vcmask 257024
      %928 = vst.msk [vmem:[%s228] sm:$0xf] %vm927, %v895
      %929 = vst.msk [vmem:[%s228 + $0x4] sm:$0xf] %vm927, %v896
      %930 = vst.msk [vmem:[%s228 + $0x8] sm:$0xf] %vm927, %v897
      %931 = vst.msk [vmem:[%s228 + $0xc] sm:$0xf] %vm927, %v898
      %932 = vst.msk [vmem:[%s228 + $0x10] sm:$0xf] %vm927, %v899
      %933 = vst.msk [vmem:[%s228 + $0x14] sm:$0xf] %vm927, %v900
      %934 = vst.msk [vmem:[%s228 + $0x18] sm:$0xf] %vm927, %v901
      %935 = vst.msk [vmem:[%s228 + $0x1c] sm:$0xf] %vm927, %v902
      %936 = vst.msk [vmem:[%s228 + $0x20] sm:$0xf] %vm927, %v903
      %937 = vst.msk [vmem:[%s228 + $0x24] sm:$0xf] %vm927, %v904
      %938 = vst.msk [vmem:[%s228 + $0x28] sm:$0xf] %vm927, %v905
      %939 = vst.msk [vmem:[%s228 + $0x2c] sm:$0xf] %vm927, %v906
      %940 = vst.msk [vmem:[%s228 + $0x30] sm:$0xf] %vm927, %v907
      %941 = vst.msk [vmem:[%s228 + $0x34] sm:$0xf] %vm927, %v908
      %942 = vst.msk [vmem:[%s228 + $0x38] sm:$0xf] %vm927, %v909
      %943 = vst.msk [vmem:[%s228 + $0x3c] sm:$0xf] %vm927, %v910
      %s944 = smul.u32 16, %s18
      %p945 = scmp.lt.s32.totalorder %s944, 47
      %s946 = scalar_select %p945, %s944, 47
      %s947 = smul.addr %s946, 4
      %s948 = scalar_lea.vmem %s5, %s947
      // Predicated region
      $region41: #{tpu_custom_call.1} parent=39 // pred_check
        %p949 = pneg %p146
      $region42: #{tpu_custom_call.1} parent=39 // pred_check_branch
        %951 = sbr.rel (%p949) target = $region44
      $region43: #{tpu_custom_call.1} parent=39 // pred_region
        %s952 = smul.u32 16, %s18
      $region44: #{tpu_custom_call.1} parent=39 // pred_fallthru
        _
    $region40: #{tpu_custom_call.1} parent=5 // pred_fallthru
      _
    %p953 = scmp.le.s32.totalorder 2, %s13
    // Predicated region
    $region45: #{tpu_custom_call.1} parent=5 // pred_check
      %p954 = pneg %p953
    $region46: #{tpu_custom_call.1} parent=5 // pred_check_branch
      %956 = sbr.rel (%p954) target = $region48
    $region47: #{tpu_custom_call.1} parent=5 // pred_region
      %s957 = ssub.s32 %s13, 2
      // Predicated region
      $region49: #{tpu_custom_call.1} parent=47 // pred_check
        %p958 = pneg %p152
      $region50: #{tpu_custom_call.1} parent=47 // pred_check_branch
        %960 = sbr.rel (%p958) target = $region52
      $region51: #{tpu_custom_call.1} parent=47 // pred_region
        %s961 = smul.u32 16, %s19
        %p962 = scmp.lt.s32.totalorder %s961, 47
        %s963 = scalar_select %p962, %s961, 47
        %s964 = smul.addr %s963, 4
        %s965 = scalar_lea.vmem %s5, %s964
      $region52: #{tpu_custom_call.1} parent=47 // pred_fallthru
        _
    $region48: #{tpu_custom_call.1} parent=5 // pred_fallthru
      _
  $region6: #{tpu_custom_call.1} parent=0 // loop_footer
    %s17 = sadd.s32 1, %s13
  $region7: #{tpu_custom_call.1} parent=0 // loop_footer_branch
    %12 = sbr.rel target = $region3
  $region8: #{tpu_custom_call.1} parent=0 // loop_exit
    _

</llo_original>
